<compile_context>
chip_gen: v6e
topology: v6e:2x2x1
jax: 0.10.0
libtpu: 0.0.40
codegen_flags: <defaults>
</compile_context>

<pallas_src>
import jax
import jax.numpy as jnp
from jax.experimental import pallas as pl
from jax.experimental.pallas import tpu as pltpu

LANE = 128  # TPU lane width


def _round_up(n, m):
    return ((n + m - 1) // m) * m


def actor_critic_kernel(xt_ref, w1t_ref, b1_ref, w2t_ref, b2_ref, out_ref):
    """Fused actor+critic forward for one lane-dense batch tile.

    xt  : [D, bb]      (batch on lanes)
    w1t : [2H, D]      packed (pi1 rows 0:H, v1 rows H:2H)
    b1  : [2H, 1]
    w2t : [2, 2H]      block-diagonal heads (row 0 = pi, row 1 = v)
    b2  : [2, 1]
    out : [2, bb]      f32
    """
    # hidden^T = relu(W1^T @ x^T + b1)   -- single MXU pass, f32 accumulation
    h = jnp.dot(w1t_ref[...], xt_ref[...], preferred_element_type=jnp.float32)
    h = jnp.maximum(h + b1_ref[...], 0.0)                  # bias + ReLU in f32
    # out^T = W2^T @ hidden^T + b2       -- lane-dense [2, bb] store
    out = jnp.dot(w2t_ref[...], h.astype(w2t_ref.dtype),
                  preferred_element_type=jnp.float32)
    out_ref[...] = out + b2_ref[...]


def _choose_tiling(B, block_b):
    """Pick (tile width bb, n_tiles) without rounding B up to a full tile."""
    n_tiles = max(1, pl.cdiv(B, block_b))
    # Keep >= 2 grid steps for large batches so the 'parallel' axis shards
    # across both v7x TensorCores; harmless on single-core v5e/v6e.
    if B >= 1024:
        n_tiles = max(n_tiles, 2)
    bb = _round_up(pl.cdiv(B, n_tiles), LANE)   # lane-aligned tile width
    return bb, n_tiles


def actor_critic_forward(x, params, *, block_b=2048,
                         compute_dtype=jnp.bfloat16,
                         vmem_limit_bytes=32 * 1024 * 1024):
    """x: [B, D] f32.  Returns (pi, v), each [B, 1] f32."""
    B, D = x.shape
    w1t = params["w1t"].astype(compute_dtype)   # [2H, D]
    b1 = params["b1"]                           # [2H, 1] (f32)
    w2t = params["w2t"].astype(compute_dtype)   # [2, 2H] block-diagonal
    b2 = params["b2"]                           # [2, 1]  (f32)
    H2 = w1t.shape[0]

    bb, n_tiles = _choose_tiling(B, block_b)
    Bp = bb * n_tiles

    # Lane-dense layout: batch on the 128-lane axis, features on sublanes.
    xt = x.astype(compute_dtype).T              # [D, B]
    if Bp != B:
        xt = jnp.pad(xt, ((0, 0), (0, Bp - B)))

    itemsize = jnp.dtype(compute_dtype).itemsize
    cost = pl.CostEstimate(
        flops=2 * Bp * D * H2 + 2 * Bp * H2 * 2,
        transcendentals=0,
        bytes_accessed=(D * Bp + H2 * D + 2 * H2) * itemsize
                       + (H2 + 2) * 4 + 2 * Bp * 4,
    )

    out = pl.pallas_call(
        actor_critic_kernel,
        out_shape=jax.ShapeDtypeStruct((2, Bp), jnp.float32),
        grid_spec=pltpu.PrefetchScalarGridSpec(
            num_scalar_prefetch=0,
            grid=(n_tiles,),
            in_specs=[
                pl.BlockSpec((D, bb), lambda i: (0, i)),    # x^T tile (lane-dense)
                pl.BlockSpec((H2, D), lambda i: (0, 0)),    # W1^T (VMEM-resident)
                pl.BlockSpec((H2, 1), lambda i: (0, 0)),    # b1   (resident)
                pl.BlockSpec((2, H2), lambda i: (0, 0)),    # W2^T (resident)
                pl.BlockSpec((2, 1), lambda i: (0, 0)),     # b2   (resident)
            ],
            out_specs=pl.BlockSpec((2, bb), lambda i: (0, i)),
        ),
        compiler_params=pltpu.CompilerParams(
            dimension_semantics=("parallel",),
            vmem_limit_bytes=vmem_limit_bytes),
        cost_estimate=cost,
    )(xt, w1t, b1, w2t, b2)

    pi = out[0, :B][:, None]                    # [B, 1]
    v = out[1, :B][:, None]                     # [B, 1]
    return pi, v


def init_params(key, input_dim, hidden=128):
    """PyTorch-style init U(-1/sqrt(fan_in), 1/sqrt(fan_in)), packed transposed.

    Returns:
      w1t : [2H, D]  = concat(pi1.weight, v1.weight) (torch [out, in] layout)
      b1  : [2H, 1]  = concat(pi1.bias, v1.bias)
      w2t : [2, 2H]  block-diagonal: row 0 cols 0:H <- pi.weight,
                                     row 1 cols H:2H <- v.weight
      b2  : [2, 1]   = [pi.bias, v.bias]
    """
    ks = jax.random.split(key, 8)

    def lin(kw, kb, fan_in, fan_out):
        bound = 1.0 / jnp.sqrt(jnp.float32(fan_in))
        w = jax.random.uniform(kw, (fan_out, fan_in), jnp.float32, -bound, bound)
        b = jax.random.uniform(kb, (fan_out,), jnp.float32, -bound, bound)
        return w, b

    w_pi1, b_pi1 = lin(ks[0], ks[1], input_dim, hidden)
    w_v1, b_v1 = lin(ks[2], ks[3], input_dim, hidden)
    w_pi, b_pi = lin(ks[4], ks[5], hidden, 1)
    w_v, b_v = lin(ks[6], ks[7], hidden, 1)

    w1t = jnp.concatenate([w_pi1, w_v1], axis=0)               # [2H, D]
    b1 = jnp.concatenate([b_pi1, b_v1], axis=0)[:, None]       # [2H, 1]
    w2t = jnp.zeros((2, 2 * hidden), jnp.float32)
    w2t = w2t.at[0, :hidden].set(w_pi[0])
    w2t = w2t.at[1, hidden:].set(w_v[0])                       # [2, 2H]
    b2 = jnp.concatenate([b_pi, b_v], axis=0)[:, None]         # [2, 1]
    return dict(w1t=w1t, b1=b1, w2t=w2t, b2=b2)


def actor_critic_reference(x, p):
    """Pure-JAX reference mirroring the PyTorch forward()."""
    H = p["w1t"].shape[0] // 2
    pi1 = jax.nn.relu(x @ p["w1t"][:H].T + p["b1"][:H, 0])
    v1 = jax.nn.relu(x @ p["w1t"][H:].T + p["b1"][H:, 0])
    pi = pi1 @ p["w2t"][0, :H][:, None] + p["b2"][0, 0]
    v = v1 @ p["w2t"][1, H:][:, None] + p["b2"][1, 0]
    return pi, v


# TODO(synk): remember/clear_memory/calc_R/calc_loss/choose_action are
# host-side RL bookkeeping (Python lists, discounted-return loop, clamp/print)
# with no Pallas equivalent; only forward() is implemented as a kernel.

if __name__ == "__main__":
    key = jax.random.PRNGKey(0)
    k_x, k_p, k_x2, k_x3 = jax.random.split(key, 4)

    input_dim = 16  # input_dims = (16,)
    params = init_params(k_p, input_dim, hidden=128)

    # --- Small batch: f32 path (exact) and default bf16 path (tolerance). ---
    batch = 8
    x = jax.random.normal(k_x, (batch, input_dim), jnp.float32)
    pi_ref, v_ref = actor_critic_reference(x, params)

    pi_f32, v_f32 = actor_critic_forward(x, params, compute_dtype=jnp.float32)
    jax.block_until_ready((pi_f32, v_f32))
    assert pi_f32.shape == (batch, 1) and v_f32.shape == (batch, 1)
    assert jnp.allclose(pi_f32, pi_ref, atol=1e-5, rtol=1e-5)
    assert jnp.allclose(v_f32, v_ref, atol=1e-5, rtol=1e-5)

    pi_bf, v_bf = actor_critic_forward(x, params)          # default bf16 compute
    jax.block_until_ready((pi_bf, v_bf))
    assert jnp.allclose(pi_bf, pi_ref, atol=5e-2, rtol=5e-2)
    assert jnp.allclose(v_bf, v_ref, atol=5e-2, rtol=5e-2)

    # --- Ragged batch (not a multiple of 128): exercises adaptive padding. ---
    batch2 = 300
    x2 = jax.random.normal(k_x2, (batch2, input_dim), jnp.float32)
    pi2, v2 = actor_critic_forward(x2, params, compute_dtype=jnp.float32)
    jax.block_until_ready((pi2, v2))
    pi2_ref, v2_ref = actor_critic_reference(x2, params)
    assert pi2.shape == (batch2, 1) and v2.shape == (batch2, 1)
    assert jnp.allclose(pi2, pi2_ref, atol=1e-5, rtol=1e-5)
    assert jnp.allclose(v2, v2_ref, atol=1e-5, rtol=1e-5)

    # --- Larger batch: forces >= 2 grid steps (v7x dual-core path). ---
    batch3 = 1500
    x3 = jax.random.normal(k_x3, (batch3, input_dim), jnp.float32)
    pi3, v3 = actor_critic_forward(x3, params, compute_dtype=jnp.float32)
    jax.block_until_ready((pi3, v3))
    pi3_ref, v3_ref = actor_critic_reference(x3, params)
    assert pi3.shape == (batch3, 1) and v3.shape == (batch3, 1)
    assert jnp.allclose(pi3, pi3_ref, atol=1e-5, rtol=1e-5)
    assert jnp.allclose(v3, v3_ref, atol=1e-5, rtol=1e-5)

    pi3b, v3b = actor_critic_forward(x3, params)           # bf16 on multi-tile grid
    jax.block_until_ready((pi3b, v3b))
    assert jnp.allclose(pi3b, pi3_ref, atol=5e-2, rtol=5e-2)
    assert jnp.allclose(v3b, v3_ref, atol=5e-2, rtol=5e-2)

    print("KERNEL_OK")
</pallas_src>

<mosaic_0001>
module attributes {stable_mosaic.version = 11 : i64} {
  func.func @actor_critic_kernel(%arg0: i32, %arg1: memref<16x128xf32, #tpu.memory_space<vmem>>, %arg2: memref<256x16xf32, #tpu.memory_space<vmem>>, %arg3: memref<256x1xf32, #tpu.memory_space<vmem>>, %arg4: memref<2x256xf32, #tpu.memory_space<vmem>>, %arg5: memref<2x1xf32, #tpu.memory_space<vmem>>, %arg6: memref<2x128xf32, #tpu.memory_space<vmem>>) attributes {dimension_semantics = [#tpu.dimension_semantics<parallel>], iteration_bounds = array<i64: 1>, scalar_prefetch = 0 : i64, scratch_operands = 0 : i64, tpu.core_type = #tpu.core_type<tc>, window_params = [{transform_indices = @transform_0, window_bounds = array<i64: 16, 128>}, {pipeline_mode = #tpu.pipeline_mode<synchronous>, transform_indices = @transform_1, window_bounds = array<i64: 256, 16>}, {pipeline_mode = #tpu.pipeline_mode<synchronous>, transform_indices = @transform_2, window_bounds = array<i64: 256, 1>}, {pipeline_mode = #tpu.pipeline_mode<synchronous>, transform_indices = @transform_3, window_bounds = array<i64: 2, 256>}, {pipeline_mode = #tpu.pipeline_mode<synchronous>, transform_indices = @transform_4, window_bounds = array<i64: 2, 1>}, {transform_indices = @transform_5, window_bounds = array<i64: 2, 128>}]} {
    %c0 = arith.constant 0 : index
    %c0_0 = arith.constant 0 : index
    %0 = vector.load %arg2[%c0, %c0_0] : memref<256x16xf32, #tpu.memory_space<vmem>>, vector<256x16xf32>
    %c0_1 = arith.constant 0 : index
    %c0_2 = arith.constant 0 : index
    %1 = vector.load %arg1[%c0_1, %c0_2] : memref<16x128xf32, #tpu.memory_space<vmem>>, vector<16x128xf32>
    %cst = arith.constant dense<0.000000e+00> : vector<256x128xf32>
    %2 = tpu.matmul %0, %1, %cst {dimension_numbers = #tpu.dot_dimension_numbers<[1], [0], [0], [1], [0, 0, 1, 1], [], []>} : vector<256x16xf32>, vector<16x128xf32>, vector<256x128xf32> -> vector<256x128xf32>
    %c0_3 = arith.constant 0 : index
    %c0_4 = arith.constant 0 : index
    %3 = vector.load %arg3[%c0_3, %c0_4] : memref<256x1xf32, #tpu.memory_space<vmem>>, vector<256x1xf32>
    %4 = vector.broadcast %3 : vector<256x1xf32> to vector<256x128xf32>
    %5 = arith.addf %2, %4 : vector<256x128xf32>
    %cst_5 = arith.constant 0.000000e+00 : f32
    %6 = vector.broadcast %cst_5 : f32 to vector<256x128xf32>
    %7 = arith.maximumf %5, %6 : vector<256x128xf32>
    %c0_6 = arith.constant 0 : index
    %c0_7 = arith.constant 0 : index
    %8 = vector.load %arg4[%c0_6, %c0_7] : memref<2x256xf32, #tpu.memory_space<vmem>>, vector<2x256xf32>
    %cst_8 = arith.constant dense<0.000000e+00> : vector<2x128xf32>
    %9 = tpu.matmul %8, %7, %cst_8 {dimension_numbers = #tpu.dot_dimension_numbers<[1], [0], [0], [1], [0, 0, 1, 1], [], []>} : vector<2x256xf32>, vector<256x128xf32>, vector<2x128xf32> -> vector<2x128xf32>
    %c0_9 = arith.constant 0 : index
    %c0_10 = arith.constant 0 : index
    %10 = vector.load %arg5[%c0_9, %c0_10] : memref<2x1xf32, #tpu.memory_space<vmem>>, vector<2x1xf32>
    %11 = vector.broadcast %10 : vector<2x1xf32> to vector<2x128xf32>
    %12 = arith.addf %9, %11 : vector<2x128xf32>
    %c0_11 = arith.constant 0 : index
    %c0_12 = arith.constant 0 : index
    %13 = vector.load %arg6[%c0_11, %c0_12] : memref<2x128xf32, #tpu.memory_space<vmem>>, vector<2x128xf32>
    tpu.vector_store %arg6[%c0_11, %c0_12], %12 {strides = array<i32>} : memref<2x128xf32, #tpu.memory_space<vmem>>, vector<2x128xf32>,
    return
  }
  func.func @transform_0(%arg0: i32) -> (i32, i32) {
    %c0_i32 = arith.constant 0 : i32
    %c0_i32_0 = arith.constant 0 : i32
    return %c0_i32, %arg0 : i32, i32
  }
  func.func @transform_1(%arg0: i32) -> (i32, i32) {
    %c0_i32 = arith.constant 0 : i32
    %c0_i32_0 = arith.constant 0 : i32
    %c0_i32_1 = arith.constant 0 : i32
    return %c0_i32, %c0_i32_0 : i32, i32
  }
  func.func @transform_2(%arg0: i32) -> (i32, i32) {
    %c0_i32 = arith.constant 0 : i32
    %c0_i32_0 = arith.constant 0 : i32
    %c0_i32_1 = arith.constant 0 : i32
    return %c0_i32, %c0_i32_0 : i32, i32
  }
  func.func @transform_3(%arg0: i32) -> (i32, i32) {
    %c0_i32 = arith.constant 0 : i32
    %c0_i32_0 = arith.constant 0 : i32
    %c0_i32_1 = arith.constant 0 : i32
    return %c0_i32, %c0_i32_0 : i32, i32
  }
  func.func @transform_4(%arg0: i32) -> (i32, i32) {
    %c0_i32 = arith.constant 0 : i32
    %c0_i32_0 = arith.constant 0 : i32
    %c0_i32_1 = arith.constant 0 : i32
    return %c0_i32, %c0_i32_0 : i32, i32
  }
  func.func @transform_5(%arg0: i32) -> (i32, i32) {
    %c0_i32 = arith.constant 0 : i32
    %c0_i32_0 = arith.constant 0 : i32
    return %c0_i32, %arg0 : i32, i32
  }
}

</mosaic_0001>

<llo_original>
// kernel: tpu_custom_call.1
$region0: #{tpu_custom_call.1}
  #allocation0 [shape = 'u32[]', space=smem, size = 0x4, offset = 0x4, fixed_abs, tag = 'smem constant byte address 0x4 - core index']
  #allocation1 [shape = 'u32[144,128]{1,0:T(1,128)}', space=vmem, size = 0x12000, scoped, tag = 'internal scratch']
  %s0 = inlined_call_operand.vmem [shape: f32[16,128], index: 0, kind: input, shape index: {}]
  %s1 = inlined_call_operand.vmem [shape: f32[256,16], index: 1, kind: input, shape index: {}]
  %s2 = inlined_call_operand.vmem [shape: f32[256,1], index: 2, kind: input, shape index: {}]
  %s3 = inlined_call_operand.vmem [shape: f32[2,256], index: 3, kind: input, shape index: {}]
  %s4 = inlined_call_operand.vmem [shape: f32[2,1], index: 4, kind: input, shape index: {}]
  %s5 = inlined_call_operand.hbm [shape: f32[2,128], index: 5, kind: output, shape index: {}]
  %s6 = sld [smem:[#allocation0]]
  $region30: #{tpu_custom_call.1} parent=0
    _
  %s8 = ssub.s32 1, %s6
  %s9 = scalar_select 0, %s8, %s6
  $region1: #{tpu_custom_call.1} parent=0
    #allocation2 [shape = 'u8[1024]{0}', space=vmem, size = 0x400, scoped, tag = 'output window, operand 0, single buffered']
    #allocation3 [shape = 's32[1]{0}', space=sflag, size = 0x4, scoped, tag = 'scoped memory for tpu_custom_call.1']
    %10 = vsyncpa [#allocation3], 0
    // Predicated region
    $region2: #{tpu_custom_call.1} parent=1 // pred_check
      _
    $region3: #{tpu_custom_call.1} parent=1 // pred_check_branch
      %12 = sbr.rel (0) target = $region5
    $region4: #{tpu_custom_call.1} parent=1 // pred_region
      _
    $region5: #{tpu_custom_call.1} parent=1 // pred_fallthru
      _
    // Predicated region
    $region6: #{tpu_custom_call.1} parent=1 // pred_check
      _
    $region7: #{tpu_custom_call.1} parent=1 // pred_check_branch
      %14 = sbr.rel (0) target = $region9
    $region8: #{tpu_custom_call.1} parent=1 // pred_region
      _
    $region9: #{tpu_custom_call.1} parent=1 // pred_fallthru
      _
    // Predicated region
    $region10: #{tpu_custom_call.1} parent=1 // pred_check
      _
    $region11: #{tpu_custom_call.1} parent=1 // pred_check_branch
      %16 = sbr.rel (0) target = $region13
    $region12: #{tpu_custom_call.1} parent=1 // pred_region
      _
    $region13: #{tpu_custom_call.1} parent=1 // pred_fallthru
      _
    // Predicated region
    $region14: #{tpu_custom_call.1} parent=1 // pred_check
      _
    $region15: #{tpu_custom_call.1} parent=1 // pred_check_branch
      %18 = sbr.rel (0) target = $region17
    $region16: #{tpu_custom_call.1} parent=1 // pred_region
      _
    $region17: #{tpu_custom_call.1} parent=1 // pred_fallthru
      _
    // Predicated region
    $region18: #{tpu_custom_call.1} parent=1 // pred_check
      _
    $region19: #{tpu_custom_call.1} parent=1 // pred_check_branch
      %20 = sbr.rel (0) target = $region21
    $region20: #{tpu_custom_call.1} parent=1 // pred_region
      _
    $region21: #{tpu_custom_call.1} parent=1 // pred_fallthru
      _
    %v21 = vld [vmem:[%s1] sm:$0xff]
    %v22 = vld [vmem:[%s1 + $0x8] sm:$0xff]
    %v23 = vld [vmem:[%s1 + $0x10] sm:$0xff]
    %v24 = vld [vmem:[%s1 + $0x18] sm:$0xff]
    %v25 = vld [vmem:[%s1 + $0x20] sm:$0xff]
    %v26 = vld [vmem:[%s1 + $0x28] sm:$0xff]
    %v27 = vld [vmem:[%s1 + $0x30] sm:$0xff]
    %v28 = vld [vmem:[%s1 + $0x38] sm:$0xff]
    %v29 = vld [vmem:[%s1 + $0x40] sm:$0xff]
    %v30 = vld [vmem:[%s1 + $0x48] sm:$0xff]
    %v31 = vld [vmem:[%s1 + $0x50] sm:$0xff]
    %v32 = vld [vmem:[%s1 + $0x58] sm:$0xff]
    %v33 = vld [vmem:[%s1 + $0x60] sm:$0xff]
    %v34 = vld [vmem:[%s1 + $0x68] sm:$0xff]
    %v35 = vld [vmem:[%s1 + $0x70] sm:$0xff]
    %v36 = vld [vmem:[%s1 + $0x78] sm:$0xff]
    %v37 = vld [vmem:[%s1 + $0x80] sm:$0xff]
    %v38 = vld [vmem:[%s1 + $0x88] sm:$0xff]
    %v39 = vld [vmem:[%s1 + $0x90] sm:$0xff]
    %v40 = vld [vmem:[%s1 + $0x98] sm:$0xff]
    %v41 = vld [vmem:[%s1 + $0xa0] sm:$0xff]
    %v42 = vld [vmem:[%s1 + $0xa8] sm:$0xff]
    %v43 = vld [vmem:[%s1 + $0xb0] sm:$0xff]
    %v44 = vld [vmem:[%s1 + $0xb8] sm:$0xff]
    %v45 = vld [vmem:[%s1 + $0xc0] sm:$0xff]
    %v46 = vld [vmem:[%s1 + $0xc8] sm:$0xff]
    %v47 = vld [vmem:[%s1 + $0xd0] sm:$0xff]
    %v48 = vld [vmem:[%s1 + $0xd8] sm:$0xff]
    %v49 = vld [vmem:[%s1 + $0xe0] sm:$0xff]
    %v50 = vld [vmem:[%s1 + $0xe8] sm:$0xff]
    %v51 = vld [vmem:[%s1 + $0xf0] sm:$0xff]
    %v52 = vld [vmem:[%s1 + $0xf8] sm:$0xff]
    %v53 = vld [vmem:[%s0] sm:$0xff]
    %v54 = vld [vmem:[%s0 + $0x8] sm:$0xff]
    %v55 = vld [vmem:[%s2] sm:$0xff]
    %v56 = vld [vmem:[%s2 + $0x8] sm:$0xff]
    %v57 = vld [vmem:[%s2 + $0x10] sm:$0xff]
    %v58 = vld [vmem:[%s2 + $0x18] sm:$0xff]
    %v59 = vld [vmem:[%s2 + $0x20] sm:$0xff]
    %v60 = vld [vmem:[%s2 + $0x28] sm:$0xff]
    %v61 = vld [vmem:[%s2 + $0x30] sm:$0xff]
    %v62 = vld [vmem:[%s2 + $0x38] sm:$0xff]
    %v63 = vld [vmem:[%s2 + $0x40] sm:$0xff]
    %v64 = vld [vmem:[%s2 + $0x48] sm:$0xff]
    %v65 = vld [vmem:[%s2 + $0x50] sm:$0xff]
    %v66 = vld [vmem:[%s2 + $0x58] sm:$0xff]
    %v67 = vld [vmem:[%s2 + $0x60] sm:$0xff]
    %v68 = vld [vmem:[%s2 + $0x68] sm:$0xff]
    %v69 = vld [vmem:[%s2 + $0x70] sm:$0xff]
    %v70 = vld [vmem:[%s2 + $0x78] sm:$0xff]
    %v71 = vld [vmem:[%s2 + $0x80] sm:$0xff]
    %v72 = vld [vmem:[%s2 + $0x88] sm:$0xff]
    %v73 = vld [vmem:[%s2 + $0x90] sm:$0xff]
    %v74 = vld [vmem:[%s2 + $0x98] sm:$0xff]
    %v75 = vld [vmem:[%s2 + $0xa0] sm:$0xff]
    %v76 = vld [vmem:[%s2 + $0xa8] sm:$0xff]
    %v77 = vld [vmem:[%s2 + $0xb0] sm:$0xff]
    %v78 = vld [vmem:[%s2 + $0xb8] sm:$0xff]
    %v79 = vld [vmem:[%s2 + $0xc0] sm:$0xff]
    %v80 = vld [vmem:[%s2 + $0xc8] sm:$0xff]
    %v81 = vld [vmem:[%s2 + $0xd0] sm:$0xff]
    %v82 = vld [vmem:[%s2 + $0xd8] sm:$0xff]
    %v83 = vld [vmem:[%s2 + $0xe0] sm:$0xff]
    %v84 = vld [vmem:[%s2 + $0xe8] sm:$0xff]
    %v85 = vld [vmem:[%s2 + $0xf0] sm:$0xff]
    %v86 = vld [vmem:[%s2 + $0xf8] sm:$0xff]
    %88 = vset.pattern.permute.xlu0 0
    %89 = vperm.xlu0 %88, %v55
    %v90 = vpop.permute.xlu0 %89
    %93 = vset.pattern.permute.xlu0 0
    %94 = vperm.xlu0 %93, %v56
    %v95 = vpop.permute.xlu0 %94
    %98 = vset.pattern.permute.xlu0 0
    %99 = vperm.xlu0 %98, %v57
    %v100 = vpop.permute.xlu0 %99
    %103 = vset.pattern.permute.xlu0 0
    %104 = vperm.xlu0 %103, %v58
    %v105 = vpop.permute.xlu0 %104
    %108 = vset.pattern.permute.xlu0 0
    %109 = vperm.xlu0 %108, %v59
    %v110 = vpop.permute.xlu0 %109
    %113 = vset.pattern.permute.xlu0 0
    %114 = vperm.xlu0 %113, %v60
    %v115 = vpop.permute.xlu0 %114
    %118 = vset.pattern.permute.xlu0 0
    %119 = vperm.xlu0 %118, %v61
    %v120 = vpop.permute.xlu0 %119
    %123 = vset.pattern.permute.xlu0 0
    %124 = vperm.xlu0 %123, %v62
    %v125 = vpop.permute.xlu0 %124
    %128 = vset.pattern.permute.xlu0 0
    %129 = vperm.xlu0 %128, %v63
    %v130 = vpop.permute.xlu0 %129
    %133 = vset.pattern.permute.xlu0 0
    %134 = vperm.xlu0 %133, %v64
    %v135 = vpop.permute.xlu0 %134
    %138 = vset.pattern.permute.xlu0 0
    %139 = vperm.xlu0 %138, %v65
    %v140 = vpop.permute.xlu0 %139
    %143 = vset.pattern.permute.xlu0 0
    %144 = vperm.xlu0 %143, %v66
    %v145 = vpop.permute.xlu0 %144
    %148 = vset.pattern.permute.xlu0 0
    %149 = vperm.xlu0 %148, %v67
    %v150 = vpop.permute.xlu0 %149
    %153 = vset.pattern.permute.xlu0 0
    %154 = vperm.xlu0 %153, %v68
    %v155 = vpop.permute.xlu0 %154
    %158 = vset.pattern.permute.xlu0 0
    %159 = vperm.xlu0 %158, %v69
    %v160 = vpop.permute.xlu0 %159
    %163 = vset.pattern.permute.xlu0 0
    %164 = vperm.xlu0 %163, %v70
    %v165 = vpop.permute.xlu0 %164
    %168 = vset.pattern.permute.xlu0 0
    %169 = vperm.xlu0 %168, %v71
    %v170 = vpop.permute.xlu0 %169
    %173 = vset.pattern.permute.xlu0 0
    %174 = vperm.xlu0 %173, %v72
    %v175 = vpop.permute.xlu0 %174
    %178 = vset.pattern.permute.xlu0 0
    %179 = vperm.xlu0 %178, %v73
    %v180 = vpop.permute.xlu0 %179
    %183 = vset.pattern.permute.xlu0 0
    %184 = vperm.xlu0 %183, %v74
    %v185 = vpop.permute.xlu0 %184
    %188 = vset.pattern.permute.xlu0 0
    %189 = vperm.xlu0 %188, %v75
    %v190 = vpop.permute.xlu0 %189
    %193 = vset.pattern.permute.xlu0 0
    %194 = vperm.xlu0 %193, %v76
    %v195 = vpop.permute.xlu0 %194
    %198 = vset.pattern.permute.xlu0 0
    %199 = vperm.xlu0 %198, %v77
    %v200 = vpop.permute.xlu0 %199
    %203 = vset.pattern.permute.xlu0 0
    %204 = vperm.xlu0 %203, %v78
    %v205 = vpop.permute.xlu0 %204
    %208 = vset.pattern.permute.xlu0 0
    %209 = vperm.xlu0 %208, %v79
    %v210 = vpop.permute.xlu0 %209
    %213 = vset.pattern.permute.xlu0 0
    %214 = vperm.xlu0 %213, %v80
    %v215 = vpop.permute.xlu0 %214
    %218 = vset.pattern.permute.xlu0 0
    %219 = vperm.xlu0 %218, %v81
    %v220 = vpop.permute.xlu0 %219
    %223 = vset.pattern.permute.xlu0 0
    %224 = vperm.xlu0 %223, %v82
    %v225 = vpop.permute.xlu0 %224
    %228 = vset.pattern.permute.xlu0 0
    %229 = vperm.xlu0 %228, %v83
    %v230 = vpop.permute.xlu0 %229
    %233 = vset.pattern.permute.xlu0 0
    %234 = vperm.xlu0 %233, %v84
    %v235 = vpop.permute.xlu0 %234
    %238 = vset.pattern.permute.xlu0 0
    %239 = vperm.xlu0 %238, %v85
    %v240 = vpop.permute.xlu0 %239
    %243 = vset.pattern.permute.xlu0 0
    %244 = vperm.xlu0 %243, %v86
    %v245 = vpop.permute.xlu0 %244
    %vm247 = vcmask 130048
    %v249 = vsel %vm247, %v21, 0
    %v252 = vsel %vm247, %v22, 0
    %v255 = vsel %vm247, %v23, 0
    %v258 = vsel %vm247, %v24, 0
    %v261 = vsel %vm247, %v25, 0
    %v264 = vsel %vm247, %v26, 0
    %v267 = vsel %vm247, %v27, 0
    %v270 = vsel %vm247, %v28, 0
    %v273 = vsel %vm247, %v29, 0
    %v276 = vsel %vm247, %v30, 0
    %v279 = vsel %vm247, %v31, 0
    %v282 = vsel %vm247, %v32, 0
    %v285 = vsel %vm247, %v33, 0
    %v288 = vsel %vm247, %v34, 0
    %v291 = vsel %vm247, %v35, 0
    %v294 = vsel %vm247, %v36, 0
    %v297 = vsel %vm247, %v37, 0
    %v300 = vsel %vm247, %v38, 0
    %v303 = vsel %vm247, %v39, 0
    %v306 = vsel %vm247, %v40, 0
    %v309 = vsel %vm247, %v41, 0
    %v312 = vsel %vm247, %v42, 0
    %v315 = vsel %vm247, %v43, 0
    %v318 = vsel %vm247, %v44, 0
    %v321 = vsel %vm247, %v45, 0
    %v324 = vsel %vm247, %v46, 0
    %v327 = vsel %vm247, %v47, 0
    %v330 = vsel %vm247, %v48, 0
    %v333 = vsel %vm247, %v49, 0
    %v336 = vsel %vm247, %v50, 0
    %v339 = vsel %vm247, %v51, 0
    %v342 = vsel %vm247, %v52, 0
    %344 = vmatprep.subr.mxu0 0.0
    %345 = vmatpush1.msra.mxu0 0.0
    %346 = vmatprep.subr.mxu0 0.0
    %347 = vmatpush1.msra.mxu0 0.0
    %348 = vmatprep.subr.mxu0 0.0
    %349 = vmatpush1.msra.mxu0 0.0
    %350 = vmatprep.subr.mxu0 0.0
    %351 = vmatpush1.msra.mxu0 0.0
    %352 = vmatprep.subr.mxu0 0.0
    %353 = vmatpush1.msra.mxu0 0.0
    %354 = vmatprep.subr.mxu0 0.0
    %355 = vmatpush1.msra.mxu0 0.0
    %356 = vmatprep.subr.mxu0 0.0
    %357 = vmatpush1.msra.mxu0 0.0
    %358 = vmatprep.subr.mxu0 0.0
    %359 = vmatpush1.msra.mxu0 0.0
    %360 = vmatprep.subr.mxu0 0.0
    %361 = vmatpush1.msra.mxu0 0.0
    %362 = vmatprep.subr.mxu0 0.0
    %363 = vmatpush1.msra.mxu0 0.0
    %364 = vmatprep.subr.mxu0 0.0
    %365 = vmatpush1.msra.mxu0 0.0
    %366 = vmatprep.subr.mxu0 0.0
    %367 = vmatpush1.msra.mxu0 0.0
    %368 = vmatprep.subr.mxu0 0.0
    %369 = vmatpush1.msra.mxu0 0.0
    %370 = vmatprep.subr.mxu0 0.0
    %371 = vmatpush1.msra.mxu0 0.0
    %372 = vmatprep.subr.mxu0 0.0
    %373 = vmatpush1.msra.mxu0 %v54
    %374 = vmatprep.subr.mxu0 0.0
    %375 = vmatpush1.msra.mxu0 %v53
    %376 = vmatprep.subr.mxu0 0.0
    %377 = vmatpush2.msra.mxu0 0.0
    %378 = vmatprep.subr.mxu0 0.0
    %379 = vmatpush2.msra.mxu0 0.0
    %380 = vmatprep.subr.mxu0 0.0
    %381 = vmatpush2.msra.mxu0 0.0
    %382 = vmatprep.subr.mxu0 0.0
    %383 = vmatpush2.msra.mxu0 0.0
    %384 = vmatprep.subr.mxu0 0.0
    %385 = vmatpush2.msra.mxu0 0.0
    %386 = vmatprep.subr.mxu0 0.0
    %387 = vmatpush2.msra.mxu0 0.0
    %388 = vmatprep.subr.mxu0 0.0
    %389 = vmatpush2.msra.mxu0 0.0
    %390 = vmatprep.subr.mxu0 0.0
    %391 = vmatpush2.msra.mxu0 0.0
    %392 = vmatprep.subr.mxu0 0.0
    %393 = vmatpush2.msra.mxu0 0.0
    %394 = vmatprep.subr.mxu0 0.0
    %395 = vmatpush2.msra.mxu0 0.0
    %396 = vmatprep.subr.mxu0 0.0
    %397 = vmatpush2.msra.mxu0 0.0
    %398 = vmatprep.subr.mxu0 0.0
    %399 = vmatpush2.msra.mxu0 0.0
    %400 = vmatprep.subr.mxu0 0.0
    %401 = vmatpush2.msra.mxu0 0.0
    %402 = vmatprep.subr.mxu0 0.0
    %403 = vmatpush2.msra.mxu0 0.0
    %404 = vmatprep.subr.mxu0 0.0
    %405 = vmatpush2.msra.mxu0 0.0
    %406 = vmatprep.subr.mxu0 0.0
    %407 = vmatpush2.msra.mxu0 0.0
    %408 = vmatprep.mubr.f32.mxu0 0.0
    %409 = vmatmul.mubr.f32.gmra.mxu0 %v249
    %v410 = vpop.f32.mrf.mxu0
    %v411 = vadd.f32 %v90, %v410
    %v412 = vpop.f32.mrf.mxu0
    %413 = vmatprep.mubr.f32.mxu0 0.0
    %414 = vmatmul.mubr.f32.gmra.mxu0 %v252
    %v415 = vpop.f32.mrf.mxu0
    %v416 = vadd.f32 %v95, %v415
    %v417 = vpop.f32.mrf.mxu0
    %418 = vmatprep.mubr.f32.mxu0 0.0
    %419 = vmatmul.mubr.f32.gmra.mxu0 %v255
    %v420 = vpop.f32.mrf.mxu0
    %v421 = vadd.f32 %v100, %v420
    %v422 = vpop.f32.mrf.mxu0
    %423 = vmatprep.mubr.f32.mxu0 0.0
    %424 = vmatmul.mubr.f32.gmra.mxu0 %v258
    %v425 = vpop.f32.mrf.mxu0
    %v426 = vadd.f32 %v105, %v425
    %v427 = vpop.f32.mrf.mxu0
    %428 = vmatprep.mubr.f32.mxu0 0.0
    %429 = vmatmul.mubr.f32.gmra.mxu0 %v261
    %v430 = vpop.f32.mrf.mxu0
    %v431 = vadd.f32 %v110, %v430
    %v432 = vpop.f32.mrf.mxu0
    %433 = vmatprep.mubr.f32.mxu0 0.0
    %434 = vmatmul.mubr.f32.gmra.mxu0 %v264
    %v435 = vpop.f32.mrf.mxu0
    %v436 = vadd.f32 %v115, %v435
    %v437 = vpop.f32.mrf.mxu0
    %438 = vmatprep.mubr.f32.mxu0 0.0
    %439 = vmatmul.mubr.f32.gmra.mxu0 %v267
    %v440 = vpop.f32.mrf.mxu0
    %v441 = vadd.f32 %v120, %v440
    %v442 = vpop.f32.mrf.mxu0
    %443 = vmatprep.mubr.f32.mxu0 0.0
    %444 = vmatmul.mubr.f32.gmra.mxu0 %v270
    %v445 = vpop.f32.mrf.mxu0
    %v446 = vadd.f32 %v125, %v445
    %v447 = vpop.f32.mrf.mxu0
    %448 = vmatprep.mubr.f32.mxu0 0.0
    %449 = vmatmul.mubr.f32.gmra.mxu0 %v273
    %v450 = vpop.f32.mrf.mxu0
    %v451 = vadd.f32 %v130, %v450
    %v452 = vpop.f32.mrf.mxu0
    %453 = vmatprep.mubr.f32.mxu0 0.0
    %454 = vmatmul.mubr.f32.gmra.mxu0 %v276
    %v455 = vpop.f32.mrf.mxu0
    %v456 = vadd.f32 %v135, %v455
    %v457 = vpop.f32.mrf.mxu0
    %458 = vmatprep.mubr.f32.mxu0 0.0
    %459 = vmatmul.mubr.f32.gmra.mxu0 %v279
    %v460 = vpop.f32.mrf.mxu0
    %v461 = vadd.f32 %v140, %v460
    %v462 = vpop.f32.mrf.mxu0
    %463 = vmatprep.mubr.f32.mxu0 0.0
    %464 = vmatmul.mubr.f32.gmra.mxu0 %v282
    %v465 = vpop.f32.mrf.mxu0
    %v466 = vadd.f32 %v145, %v465
    %v467 = vpop.f32.mrf.mxu0
    %468 = vmatprep.mubr.f32.mxu0 0.0
    %469 = vmatmul.mubr.f32.gmra.mxu0 %v285
    %v470 = vpop.f32.mrf.mxu0
    %v471 = vadd.f32 %v150, %v470
    %v472 = vpop.f32.mrf.mxu0
    %473 = vmatprep.mubr.f32.mxu0 0.0
    %474 = vmatmul.mubr.f32.gmra.mxu0 %v288
    %v475 = vpop.f32.mrf.mxu0
    %v476 = vadd.f32 %v155, %v475
    %v477 = vpop.f32.mrf.mxu0
    %478 = vmatprep.mubr.f32.mxu0 0.0
    %479 = vmatmul.mubr.f32.gmra.mxu0 %v291
    %v480 = vpop.f32.mrf.mxu0
    %v481 = vadd.f32 %v160, %v480
    %v482 = vpop.f32.mrf.mxu0
    %483 = vmatprep.mubr.f32.mxu0 0.0
    %484 = vmatmul.mubr.f32.gmra.mxu0 %v294
    %v485 = vpop.f32.mrf.mxu0
    %v486 = vadd.f32 %v165, %v485
    %v487 = vpop.f32.mrf.mxu0
    %488 = vmatprep.mubr.f32.mxu0 0.0
    %489 = vmatmul.mubr.f32.gmra.mxu0 %v297
    %v490 = vpop.f32.mrf.mxu0
    %v491 = vadd.f32 %v170, %v490
    %v492 = vpop.f32.mrf.mxu0
    %493 = vmatprep.mubr.f32.mxu0 0.0
    %494 = vmatmul.mubr.f32.gmra.mxu0 %v300
    %v495 = vpop.f32.mrf.mxu0
    %v496 = vadd.f32 %v175, %v495
    %v497 = vpop.f32.mrf.mxu0
    %498 = vmatprep.mubr.f32.mxu0 0.0
    %499 = vmatmul.mubr.f32.gmra.mxu0 %v303
    %v500 = vpop.f32.mrf.mxu0
    %v501 = vadd.f32 %v180, %v500
    %v502 = vpop.f32.mrf.mxu0
    %503 = vmatprep.mubr.f32.mxu0 0.0
    %504 = vmatmul.mubr.f32.gmra.mxu0 %v306
    %v505 = vpop.f32.mrf.mxu0
    %v506 = vadd.f32 %v185, %v505
    %v507 = vpop.f32.mrf.mxu0
    %508 = vmatprep.mubr.f32.mxu0 0.0
    %509 = vmatmul.mubr.f32.gmra.mxu0 %v309
    %v510 = vpop.f32.mrf.mxu0
    %v511 = vadd.f32 %v190, %v510
    %v512 = vpop.f32.mrf.mxu0
    %513 = vmatprep.mubr.f32.mxu0 0.0
    %514 = vmatmul.mubr.f32.gmra.mxu0 %v312
    %v515 = vpop.f32.mrf.mxu0
    %v516 = vadd.f32 %v195, %v515
    %v517 = vpop.f32.mrf.mxu0
    %518 = vmatprep.mubr.f32.mxu0 0.0
    %519 = vmatmul.mubr.f32.gmra.mxu0 %v315
    %v520 = vpop.f32.mrf.mxu0
    %v521 = vadd.f32 %v200, %v520
    %v522 = vpop.f32.mrf.mxu0
    %523 = vmatprep.mubr.f32.mxu0 0.0
    %524 = vmatmul.mubr.f32.gmra.mxu0 %v318
    %v525 = vpop.f32.mrf.mxu0
    %v526 = vadd.f32 %v205, %v525
    %v527 = vpop.f32.mrf.mxu0
    %528 = vmatprep.mubr.f32.mxu0 0.0
    %529 = vmatmul.mubr.f32.gmra.mxu0 %v321
    %v530 = vpop.f32.mrf.mxu0
    %v531 = vadd.f32 %v210, %v530
    %v532 = vpop.f32.mrf.mxu0
    %533 = vmatprep.mubr.f32.mxu0 0.0
    %534 = vmatmul.mubr.f32.gmra.mxu0 %v324
    %v535 = vpop.f32.mrf.mxu0
    %v536 = vadd.f32 %v215, %v535
    %v537 = vpop.f32.mrf.mxu0
    %538 = vmatprep.mubr.f32.mxu0 0.0
    %539 = vmatmul.mubr.f32.gmra.mxu0 %v327
    %v540 = vpop.f32.mrf.mxu0
    %v541 = vadd.f32 %v220, %v540
    %v542 = vpop.f32.mrf.mxu0
    %543 = vmatprep.mubr.f32.mxu0 0.0
    %544 = vmatmul.mubr.f32.gmra.mxu0 %v330
    %v545 = vpop.f32.mrf.mxu0
    %v546 = vadd.f32 %v225, %v545
    %v547 = vpop.f32.mrf.mxu0
    %548 = vmatprep.mubr.f32.mxu0 0.0
    %549 = vmatmul.mubr.f32.gmra.mxu0 %v333
    %v550 = vpop.f32.mrf.mxu0
    %v551 = vadd.f32 %v230, %v550
    %v552 = vpop.f32.mrf.mxu0
    %553 = vmatprep.mubr.f32.mxu0 0.0
    %554 = vmatmul.mubr.f32.gmra.mxu0 %v336
    %v555 = vpop.f32.mrf.mxu0
    %v556 = vadd.f32 %v235, %v555
    %v557 = vpop.f32.mrf.mxu0
    %558 = vmatprep.mubr.f32.mxu0 0.0
    %559 = vmatmul.mubr.f32.gmra.mxu0 %v339
    %v560 = vpop.f32.mrf.mxu0
    %v561 = vadd.f32 %v240, %v560
    %v562 = vpop.f32.mrf.mxu0
    %563 = vmatprep.mubr.f32.mxu0 0.0
    %564 = vmatmul.mubr.f32.gmra.mxu0 %v342
    %v565 = vpop.f32.mrf.mxu0
    %v566 = vadd.f32 %v245, %v565
    %v567 = vpop.f32.mrf.mxu0
    %568 = vdwg.mxu0
    %v569 = vmax.f32 %v411, 0.0
    %v570 = vmax.f32 %v416, 0.0
    %v571 = vmax.f32 %v421, 0.0
    %v572 = vmax.f32 %v426, 0.0
    %v573 = vmax.f32 %v431, 0.0
    %v574 = vmax.f32 %v436, 0.0
    %v575 = vmax.f32 %v441, 0.0
    %v576 = vmax.f32 %v446, 0.0
    %v577 = vmax.f32 %v451, 0.0
    %v578 = vmax.f32 %v456, 0.0
    %v579 = vmax.f32 %v461, 0.0
    %v580 = vmax.f32 %v466, 0.0
    %v581 = vmax.f32 %v471, 0.0
    %v582 = vmax.f32 %v476, 0.0
    %v583 = vmax.f32 %v481, 0.0
    %v584 = vmax.f32 %v486, 0.0
    %v585 = vmax.f32 %v491, 0.0
    %v586 = vmax.f32 %v496, 0.0
    %v587 = vmax.f32 %v501, 0.0
    %v588 = vmax.f32 %v506, 0.0
    %v589 = vmax.f32 %v511, 0.0
    %v590 = vmax.f32 %v516, 0.0
    %v591 = vmax.f32 %v521, 0.0
    %v592 = vmax.f32 %v526, 0.0
    %v593 = vmax.f32 %v531, 0.0
    %v594 = vmax.f32 %v536, 0.0
    %v595 = vmax.f32 %v541, 0.0
    %v596 = vmax.f32 %v546, 0.0
    %v597 = vmax.f32 %v551, 0.0
    %v598 = vmax.f32 %v556, 0.0
    %v599 = vmax.f32 %v561, 0.0
    %v600 = vmax.f32 %v566, 0.0
    %v601 = vld [vmem:[%s3] sm:$0xf]
    %v602 = vld [vmem:[%s4] sm:$0x3]
    %604 = vset.pattern.permute.xlu0 0
    %605 = vperm.xlu0 %604, %v602
    %v606 = vpop.permute.xlu0 %605
    %v610 = vunpack.c.l.s4 1983009808
    %v611 = vunpack.c.0.s8 %v610
    %v612 = vlaneseq
    %v613 = vshrl.u32 %v612, 7
    %v614 = vsub.s32 %v611, %v613
    %v615 = vrot.slane %v601, %v614
    %v616 = vcombine.high %v615, %v615
    %619 = vmatprep.subr.mxu0 0.0
    %620 = vmatpush1.msra.mxu0 %v584
    %621 = vmatprep.subr.mxu0 0.0
    %622 = vmatpush1.msra.mxu0 %v583
    %623 = vmatprep.subr.mxu0 0.0
    %624 = vmatpush1.msra.mxu0 %v582
    %625 = vmatprep.subr.mxu0 0.0
    %626 = vmatpush1.msra.mxu0 %v581
    %627 = vmatprep.subr.mxu0 0.0
    %628 = vmatpush1.msra.mxu0 %v580
    %629 = vmatprep.subr.mxu0 0.0
    %630 = vmatpush1.msra.mxu0 %v579
    %631 = vmatprep.subr.mxu0 0.0
    %632 = vmatpush1.msra.mxu0 %v578
    %633 = vmatprep.subr.mxu0 0.0
    %634 = vmatpush1.msra.mxu0 %v577
    %635 = vmatprep.subr.mxu0 0.0
    %636 = vmatpush1.msra.mxu0 %v576
    %637 = vmatprep.subr.mxu0 0.0
    %638 = vmatpush1.msra.mxu0 %v575
    %639 = vmatprep.subr.mxu0 0.0
    %640 = vmatpush1.msra.mxu0 %v574
    %641 = vmatprep.subr.mxu0 0.0
    %642 = vmatpush1.msra.mxu0 %v573
    %643 = vmatprep.subr.mxu0 0.0
    %644 = vmatpush1.msra.mxu0 %v572
    %645 = vmatprep.subr.mxu0 0.0
    %646 = vmatpush1.msra.mxu0 %v571
    %647 = vmatprep.subr.mxu0 0.0
    %648 = vmatpush1.msra.mxu0 %v570
    %649 = vmatprep.subr.mxu0 0.0
    %650 = vmatpush1.msra.mxu0 %v569
    %651 = vmatprep.subr.mxu0 0.0
    %652 = vmatpush2.msra.mxu0 %v600
    %653 = vmatprep.subr.mxu0 0.0
    %654 = vmatpush2.msra.mxu0 %v599
    %655 = vmatprep.subr.mxu0 0.0
    %656 = vmatpush2.msra.mxu0 %v598
    %657 = vmatprep.subr.mxu0 0.0
    %658 = vmatpush2.msra.mxu0 %v597
    %659 = vmatprep.subr.mxu0 0.0
    %660 = vmatpush2.msra.mxu0 %v596
    %661 = vmatprep.subr.mxu0 0.0
    %662 = vmatpush2.msra.mxu0 %v595
    %663 = vmatprep.subr.mxu0 0.0
    %664 = vmatpush2.msra.mxu0 %v594
    %665 = vmatprep.subr.mxu0 0.0
    %666 = vmatpush2.msra.mxu0 %v593
    %667 = vmatprep.subr.mxu0 0.0
    %668 = vmatpush2.msra.mxu0 %v592
    %669 = vmatprep.subr.mxu0 0.0
    %670 = vmatpush2.msra.mxu0 %v591
    %671 = vmatprep.subr.mxu0 0.0
    %672 = vmatpush2.msra.mxu0 %v590
    %673 = vmatprep.subr.mxu0 0.0
    %674 = vmatpush2.msra.mxu0 %v589
    %675 = vmatprep.subr.mxu0 0.0
    %676 = vmatpush2.msra.mxu0 %v588
    %677 = vmatprep.subr.mxu0 0.0
    %678 = vmatpush2.msra.mxu0 %v587
    %679 = vmatprep.subr.mxu0 0.0
    %680 = vmatpush2.msra.mxu0 %v586
    %681 = vmatprep.subr.mxu0 0.0
    %682 = vmatpush2.msra.mxu0 %v585
    %683 = vmatprep.mubr.f32.mxu0 %v616
    %684 = vmatmul.mubr.f32.gmra.mxu0 %v615
    %v685 = vpop.f32.mrf.mxu0
    %v686 = vadd.f32 %v606, %v685
    %v687 = vpop.f32.mrf.mxu0
    %688 = vdwg.mxu0
    %689 = vst [vmem:[#allocation2] sm:$0x3] %v686
    // Predicated region
    $region22: #{tpu_custom_call.1} parent=1 // pred_check
      _
    $region23: #{tpu_custom_call.1} parent=1 // pred_check_branch
      %691 = sbr.rel (0) target = $region25
    $region24: #{tpu_custom_call.1} parent=1 // pred_region
      %s693 = ssub.s32 32, 32
      %694 = vsyncadd [#allocation3], %s693
      %s696 = sshll.u32 [#allocation2], 4
      %s697 = int_to_ptr.vmem [resolvable:$true] %s696
      %699 = dma.vmem_to_hbm [thread:$0]  %s697, 32, %s5, [#allocation3]
    $region25: #{tpu_custom_call.1} parent=1 // pred_fallthru
      _
    // Predicated region
    $region26: #{tpu_custom_call.1} parent=1 // pred_check
      _
    $region27: #{tpu_custom_call.1} parent=1 // pred_check_branch
      %701 = sbr.rel (0) target = $region29
    $region28: #{tpu_custom_call.1} parent=1 // pred_region
      %702 = dma.done [#allocation3], 32
    $region29: #{tpu_custom_call.1} parent=1 // pred_fallthru
      _
    %703 = vsyncpa [#allocation3], 1

</llo_original>
